<compile_context>
chip_gen: v6e
topology: v6e:2x2x1
jax: 0.10.0
libtpu: 0.0.40
codegen_flags: <defaults>
</compile_context>

<pallas_src>
import functools

import jax
import jax.numpy as jnp
from jax.experimental import pallas as pl
from jax.experimental.pallas import tpu as pltpu

_LANES = 128
_DEFAULT_TILE_ROWS = 1024  # (1024, 128) f32 = 512 KiB per stream buffer


def _mcc_reward_kernel(pos_ref, vel_ref, act_ref, out_ref, *,
                       goal_position, goal_velocity):
    pos = pos_ref[...]                                   # (rows, 128) f32
    vel = vel_ref[...]                                   # (rows, 128) f32
    act = act_ref[...]                                   # (rows, 128) f32

    # done = (next_state >= goal).all(-1)  ==  (pos >= gp) & (vel >= gv)
    done = (pos >= jnp.float32(goal_position)) & (vel >= jnp.float32(goal_velocity))

    # reward = where(done, 200, 0) - action**2 * 0.1
    reward = jnp.where(done, jnp.float32(200.0), jnp.float32(0.0))
    out_ref[...] = reward - act * act * jnp.float32(0.1)


def _pad_to(x, n):
    return jnp.pad(x, (0, n - x.shape[0])) if x.shape[0] != n else x


def mountain_car_continuous_reward(state, action, next_state, goal_velocity=0.0,
                                   tile_rows=_DEFAULT_TILE_ROWS):
    """Pallas TPU implementation of MountainCarContinuousReward.forward."""
    # Output shape follows state.shape[:-1]; state's values are otherwise unused,
    # so it is NOT passed to the kernel (removes a dead HBM->VMEM DMA).
    batch_shape = state.shape[:-1]
    B = 1
    for d in batch_shape:
        B *= int(d)

    pos = next_state[..., 0].reshape(B).astype(jnp.float32)
    vel = next_state[..., 1].reshape(B).astype(jnp.float32)
    act = action.reshape(B).astype(jnp.float32)          # trailing dim 1 squeezed

    # Lane-dense layout: batch lives on the 128-lane axis.
    rows = pl.cdiv(B, _LANES)
    if rows <= tile_rows:
        block_rows = rows                                # single full-array block
        grid_rows = 1
    else:
        block_rows = tile_rows
        grid_rows = pl.cdiv(rows, tile_rows)
    rows_padded = grid_rows * block_rows
    n_padded = rows_padded * _LANES

    def to_tiles(x):
        return _pad_to(x, n_padded).reshape(rows_padded, _LANES)

    pos2, vel2, act2 = to_tiles(pos), to_tiles(vel), to_tiles(act)

    kernel = functools.partial(
        _mcc_reward_kernel,
        goal_position=0.45,
        goal_velocity=float(goal_velocity),
    )

    spec = pl.BlockSpec((block_rows, _LANES), lambda i: (i, 0))
    out = pl.pallas_call(
        kernel,
        out_shape=jax.ShapeDtypeStruct((rows_padded, _LANES), jnp.float32),
        grid=(grid_rows,),
        in_specs=[spec, spec, spec],
        out_specs=spec,
        compiler_params=pltpu.CompilerParams(
            dimension_semantics=("parallel",),
            vmem_limit_bytes=32 * 1024 * 1024,
        ),
    )(pos2, vel2, act2)

    # Drop padded lanes; never let them leak into the result.
    return out.reshape(-1)[:B].reshape(batch_shape)


def _reference(state, action, next_state, goal_velocity=0.0):
    del state
    goal = jnp.array([0.45, goal_velocity], dtype=jnp.float32)
    done = jnp.all(next_state >= goal, axis=-1)
    reward = jnp.where(done, jnp.float32(200.0), jnp.float32(0.0))
    reward = reward - jnp.square(action)[..., 0] * 0.1
    return reward


if __name__ == "__main__":
    key = jax.random.PRNGKey(0)

    def make_inputs(key, B):
        k1, k2, k3 = jax.random.split(key, 3)
        # MountainCarContinuous: obs = [position, velocity], action = [force]
        state = jax.random.uniform(k1, (B, 2), dtype=jnp.float32,
                                   minval=-1.0, maxval=1.0)
        action = jax.random.uniform(k2, (B, 1), dtype=jnp.float32,
                                    minval=-1.0, maxval=1.0)
        # Spread next_state around the goal so some rows trigger `done`.
        next_state = jax.random.uniform(k3, (B, 2), dtype=jnp.float32,
                                        minval=-0.5, maxval=1.0)
        return state, action, next_state

    ka, kb = jax.random.split(key)

    # Small batch (single-tile path).
    state, action, next_state = make_inputs(ka, 8)
    reward = jax.block_until_ready(
        mountain_car_continuous_reward(state, action, next_state))
    expected = _reference(state, action, next_state)
    assert reward.shape == (8,)
    assert jnp.allclose(reward, expected, atol=1e-6), (reward, expected)

    # Slightly larger batch that exercises lane padding (B not multiple of 128).
    state, action, next_state = make_inputs(kb, 300)
    reward = jax.block_until_ready(
        mountain_car_continuous_reward(state, action, next_state))
    expected = _reference(state, action, next_state)
    assert reward.shape == (300,)
    assert jnp.allclose(reward, expected, atol=1e-6)

    print("KERNEL_OK")
</pallas_src>

<mosaic_0001>
module attributes {stable_mosaic.version = 11 : i64} {
  func.func @_mcc_reward_kernel(%arg0: i32, %arg1: memref<1x128xf32, #tpu.memory_space<vmem>>, %arg2: memref<1x128xf32, #tpu.memory_space<vmem>>, %arg3: memref<1x128xf32, #tpu.memory_space<vmem>>, %arg4: memref<1x128xf32, #tpu.memory_space<vmem>>) attributes {dimension_semantics = [#tpu.dimension_semantics<parallel>], iteration_bounds = array<i64: 1>, scalar_prefetch = 0 : i64, scratch_operands = 0 : i64, tpu.core_type = #tpu.core_type<tc>, window_params = [{transform_indices = @transform_0, window_bounds = array<i64: 1, 128>}, {transform_indices = @transform_1, window_bounds = array<i64: 1, 128>}, {transform_indices = @transform_2, window_bounds = array<i64: 1, 128>}, {transform_indices = @transform_3, window_bounds = array<i64: 1, 128>}]} {
    %c0 = arith.constant 0 : index
    %c0_0 = arith.constant 0 : index
    %0 = vector.load %arg1[%c0, %c0_0] : memref<1x128xf32, #tpu.memory_space<vmem>>, vector<1x128xf32>
    %c0_1 = arith.constant 0 : index
    %c0_2 = arith.constant 0 : index
    %1 = vector.load %arg2[%c0_1, %c0_2] : memref<1x128xf32, #tpu.memory_space<vmem>>, vector<1x128xf32>
    %c0_3 = arith.constant 0 : index
    %c0_4 = arith.constant 0 : index
    %2 = vector.load %arg3[%c0_3, %c0_4] : memref<1x128xf32, #tpu.memory_space<vmem>>, vector<1x128xf32>
    %cst = arith.constant 4.500000e-01 : f32
    %3 = vector.broadcast %cst : f32 to vector<1x128xf32>
    %4 = arith.cmpf oge, %0, %3 : vector<1x128xf32>
    %cst_5 = arith.constant 0.000000e+00 : f32
    %5 = vector.broadcast %cst_5 : f32 to vector<1x128xf32>
    %6 = arith.cmpf oge, %1, %5 : vector<1x128xf32>
    %7 = arith.andi %4, %6 : vector<1x128xi1>
    %cst_6 = arith.constant 2.000000e+02 : f32
    %cst_7 = arith.constant 0.000000e+00 : f32
    %8 = vector.broadcast %cst_6 : f32 to vector<1x128xf32>
    %9 = vector.broadcast %cst_7 : f32 to vector<1x128xf32>
    %10 = arith.select %7, %8, %9 : vector<1x128xi1>, vector<1x128xf32>
    %11 = arith.mulf %2, %2 : vector<1x128xf32>
    %cst_8 = arith.constant 1.000000e-01 : f32
    %12 = vector.broadcast %cst_8 : f32 to vector<1x128xf32>
    %13 = arith.mulf %11, %12 : vector<1x128xf32>
    %14 = arith.subf %10, %13 : vector<1x128xf32>
    %c0_9 = arith.constant 0 : index
    %c0_10 = arith.constant 0 : index
    %15 = vector.load %arg4[%c0_9, %c0_10] : memref<1x128xf32, #tpu.memory_space<vmem>>, vector<1x128xf32>
    tpu.vector_store %arg4[%c0_9, %c0_10], %14 {strides = array<i32>} : memref<1x128xf32, #tpu.memory_space<vmem>>, vector<1x128xf32>,
    return
  }
  func.func @transform_0(%arg0: i32) -> (i32, i32) {
    %c0_i32 = arith.constant 0 : i32
    %c0_i32_0 = arith.constant 0 : i32
    return %arg0, %c0_i32 : i32, i32
  }
  func.func @transform_1(%arg0: i32) -> (i32, i32) {
    %c0_i32 = arith.constant 0 : i32
    %c0_i32_0 = arith.constant 0 : i32
    return %arg0, %c0_i32 : i32, i32
  }
  func.func @transform_2(%arg0: i32) -> (i32, i32) {
    %c0_i32 = arith.constant 0 : i32
    %c0_i32_0 = arith.constant 0 : i32
    return %arg0, %c0_i32 : i32, i32
  }
  func.func @transform_3(%arg0: i32) -> (i32, i32) {
    %c0_i32 = arith.constant 0 : i32
    %c0_i32_0 = arith.constant 0 : i32
    return %arg0, %c0_i32 : i32, i32
  }
}

</mosaic_0001>

<llo_original>
// kernel: tpu_custom_call.1
$region0: #{tpu_custom_call.1}
  #allocation0 [shape = 'u32[]', space=smem, size = 0x4, offset = 0x4, fixed_abs, tag = 'smem constant byte address 0x4 - core index']
  #allocation1 [shape = 'u32[144,128]{1,0:T(1,128)}', space=vmem, size = 0x12000, scoped, tag = 'internal scratch']
  %s0 = inlined_call_operand.hbm [shape: f32[1,128], index: 0, kind: input, shape index: {}]
  %s1 = inlined_call_operand.vmem [shape: f32[1,128], index: 1, kind: input, shape index: {}]
  %s2 = inlined_call_operand.vmem [shape: f32[1,128], index: 2, kind: input, shape index: {}]
  %s3 = inlined_call_operand.hbm [shape: f32[1,128], index: 3, kind: output, shape index: {}]
  %s4 = sld [smem:[#allocation0]]
  $region26: #{tpu_custom_call.1} parent=0
    _
  %s6 = ssub.s32 1, %s4
  %s7 = scalar_select 0, %s6, %s4
  $region1: #{tpu_custom_call.1} parent=0
    #allocation2 [shape = 'u8[512]{0}', space=vmem, size = 0x400, scoped, tag = 'input window, operand 0, single buffered']
    #allocation3 [shape = 's32[1]{0}', space=sflag, size = 0x4, scoped, tag = 'scoped memory for tpu_custom_call.1']
    #allocation4 [shape = 's32[1]{0}', space=sflag, size = 0x4, scoped, tag = 'scoped memory for tpu_custom_call.1']
    #allocation5 [shape = 'u8[512]{0}', space=vmem, size = 0x400, scoped, tag = 'output window, operand 0, single buffered']
    %8 = vsyncpa [#allocation3], 0
    %9 = vsyncpa [#allocation4], 0
    // Predicated region
    $region2: #{tpu_custom_call.1} parent=1 // pred_check
      _
    $region3: #{tpu_custom_call.1} parent=1 // pred_check_branch
      %11 = sbr.rel (0) target = $region5
    $region4: #{tpu_custom_call.1} parent=1 // pred_region
      %s13 = ssub.s32 16, 16
      %14 = vsyncadd [#allocation3], %s13
      %s16 = sshll.u32 [#allocation2], 4
      %s17 = int_to_ptr.vmem [resolvable:$true] %s16
      %19 = dma.hbm_to_vmem [thread:$0]  %s0, 16, %s17, [#allocation3]
    $region5: #{tpu_custom_call.1} parent=1 // pred_fallthru
      _
    // Predicated region
    $region6: #{tpu_custom_call.1} parent=1 // pred_check
      _
    $region7: #{tpu_custom_call.1} parent=1 // pred_check_branch
      %21 = sbr.rel (0) target = $region9
    $region8: #{tpu_custom_call.1} parent=1 // pred_region
      _
    $region9: #{tpu_custom_call.1} parent=1 // pred_fallthru
      _
    // Predicated region
    $region10: #{tpu_custom_call.1} parent=1 // pred_check
      _
    $region11: #{tpu_custom_call.1} parent=1 // pred_check_branch
      %23 = sbr.rel (0) target = $region13
    $region12: #{tpu_custom_call.1} parent=1 // pred_region
      _
    $region13: #{tpu_custom_call.1} parent=1 // pred_fallthru
      _
    // Predicated region
    $region14: #{tpu_custom_call.1} parent=1 // pred_check
      _
    $region15: #{tpu_custom_call.1} parent=1 // pred_check_branch
      %25 = sbr.rel (0) target = $region17
    $region16: #{tpu_custom_call.1} parent=1 // pred_region
      %26 = dma.done [#allocation3], 16
    $region17: #{tpu_custom_call.1} parent=1 // pred_fallthru
      _
    %v27 = vld [vmem:[#allocation2] sm:$0x1]
    %v28 = vld [vmem:[%s1] sm:$0x1]
    %v29 = vld [vmem:[%s2] sm:$0x1]
    %vm30 = vcmp.ge.f32.partialorder %v27, 0.45
    %vm31 = vcmp.ge.f32.partialorder %v28, 0.0
    %vm32 = vmand %vm30, %vm31
    %v33 = vsel %vm32, 200.0, 0.0
    %v34 = vmul.f32 %v29, %v29
    %v35 = vmul.f32 %v34, 0.1
    %v36 = vsub.f32 %v33, %v35
    %37 = vst [vmem:[#allocation5] sm:$0x1] %v36
    // Predicated region
    $region18: #{tpu_custom_call.1} parent=1 // pred_check
      _
    $region19: #{tpu_custom_call.1} parent=1 // pred_check_branch
      %39 = sbr.rel (0) target = $region21
    $region20: #{tpu_custom_call.1} parent=1 // pred_region
      %s41 = ssub.s32 16, 16
      %42 = vsyncadd [#allocation4], %s41
      %s44 = sshll.u32 [#allocation5], 4
      %s45 = int_to_ptr.vmem [resolvable:$true] %s44
      %47 = dma.vmem_to_hbm [thread:$0]  %s45, 16, %s3, [#allocation4]
    $region21: #{tpu_custom_call.1} parent=1 // pred_fallthru
      _
    // Predicated region
    $region22: #{tpu_custom_call.1} parent=1 // pred_check
      _
    $region23: #{tpu_custom_call.1} parent=1 // pred_check_branch
      %49 = sbr.rel (0) target = $region25
    $region24: #{tpu_custom_call.1} parent=1 // pred_region
      %50 = dma.done [#allocation4], 16
    $region25: #{tpu_custom_call.1} parent=1 // pred_fallthru
      _
    %51 = vsyncpa [#allocation3], 1
    %52 = vsyncpa [#allocation4], 1

</llo_original>
